<compile_context>
chip_gen: v7x
topology: tpu7x:2x2x1
jax: 0.10.0
libtpu: 0.0.40
codegen_flags: <defaults>
</compile_context>

<pallas_src>
import jax
import jax.numpy as jnp
from jax.experimental import pallas as pl
from jax.experimental.pallas import tpu as pltpu


def _stroke_copy_kernel(stroke_ref, out_ref):
    # Identity forward: out = stroke (single unmasked lane-dense VMEM copy).
    out_ref[...] = stroke_ref[...]


_LANE = 128            # vreg lane width: last dim of the slab is always 128.
_TILE_ROWS = 512       # (512, 128) f32 tile = 256 KiB/block on the large path.
# Switch to a tiled grid once input+output would exceed ~8 MiB of VMEM —
# comfortably below the 32 MiB scoped default (v7x physical VMEM is 64 MiB).
_GRID_THRESHOLD_BYTES = 8 * 1024 * 1024


def _lane_dense_slab(stroke: jax.Array):
    """Row-major flatten + zero-pad to a lane-dense (rows, 128) slab."""
    n = stroke.size
    flat = stroke.reshape(-1)
    pad = (-n) % _LANE          # static Python int (derived from shape only)
    if pad:
        flat = jnp.pad(flat, (0, pad))
    return flat.reshape(flat.size // _LANE, _LANE), pad


@jax.jit
def stroke_forward(stroke: jax.Array) -> jax.Array:
    """Pallas equivalent of Stroke.forward(): return the stored parameter."""
    orig_shape = stroke.shape
    n = stroke.size

    slab, pad = _lane_dense_slab(stroke)
    rows = slab.shape[0]
    total_vmem_bytes = 2 * slab.size * slab.dtype.itemsize  # input + output copy

    cost = pl.CostEstimate(
        flops=0,
        transcendentals=0,
        bytes_accessed=2 * slab.size * slab.dtype.itemsize,
    )

    if total_vmem_bytes <= _GRID_THRESHOLD_BYTES:
        # Small path: whole-array VMEM block, no grid (fastest for tiny params).
        out = pl.pallas_call(
            _stroke_copy_kernel,
            out_shape=jax.ShapeDtypeStruct(slab.shape, slab.dtype),
            in_specs=[pl.BlockSpec(memory_space=pltpu.MemorySpace.VMEM)],
            out_specs=pl.BlockSpec(memory_space=pltpu.MemorySpace.VMEM),
            cost_estimate=cost,
        )(slab)
    else:
        # Large path: (512, 128) row tiles keep VMEM usage bounded on v7x.
        grid = (pl.cdiv(rows, _TILE_ROWS),)
        out = pl.pallas_call(
            _stroke_copy_kernel,
            out_shape=jax.ShapeDtypeStruct(slab.shape, slab.dtype),
            grid=grid,
            in_specs=[pl.BlockSpec((_TILE_ROWS, _LANE), lambda i: (i, 0))],
            out_specs=pl.BlockSpec((_TILE_ROWS, _LANE), lambda i: (i, 0)),
            compiler_params=pltpu.CompilerParams(
                dimension_semantics=("parallel",)
            ),
            cost_estimate=cost,
        )(slab)

    flat = out.reshape(-1)
    if pad:
        flat = flat[:n]         # drop lane padding (metadata-only under jit)
    return flat.reshape(orig_shape)


class StrokePallas:
    """Minimal stand-in for the PyTorch nn.Module: holds the parameter."""

    def __init__(self, stroke: jax.Array):
        self.stroke = stroke  # the "nn.Parameter"

    def __call__(self) -> jax.Array:
        return stroke_forward(self.stroke)


if __name__ == "__main__":
    # Deterministic parameter initialization (synthetic; no checkpoint load).
    key = jax.random.PRNGKey(0)
    stroke_param = jax.random.normal(key, (2, 4, 16, 16), dtype=jnp.float32)

    module = StrokePallas(stroke_param)
    out = module()
    out = jax.block_until_ready(out)

    # Forward must return the parameter exactly (bit-identical copy).
    assert out.shape == stroke_param.shape
    assert out.dtype == stroke_param.dtype
    assert bool(jnp.array_equal(out, stroke_param))

    # Also exercise the padded (non-multiple-of-128) fallback path once.
    odd_param = jax.random.normal(jax.random.PRNGKey(1), (3, 5, 7), dtype=jnp.float32)
    odd_out = jax.block_until_ready(stroke_forward(odd_param))
    assert odd_out.shape == odd_param.shape
    assert bool(jnp.array_equal(odd_out, odd_param))

    print("KERNEL_OK")
</pallas_src>

<mosaic_0001>
module attributes {stable_mosaic.version = 11 : i64} {
  func.func @_stroke_copy_kernel(%arg0: memref<16x128xf32, #tpu.memory_space<vmem>>, %arg1: memref<16x128xf32, #tpu.memory_space<vmem>>) attributes {dimension_semantics = [], scalar_prefetch = 0 : i64, scratch_operands = 0 : i64, tpu.core_type = #tpu.core_type<tc>} {
    %c0 = arith.constant 0 : index
    %c0_0 = arith.constant 0 : index
    %0 = vector.load %arg0[%c0, %c0_0] : memref<16x128xf32, #tpu.memory_space<vmem>>, vector<16x128xf32>
    %c0_1 = arith.constant 0 : index
    %c0_2 = arith.constant 0 : index
    %1 = vector.load %arg1[%c0_1, %c0_2] : memref<16x128xf32, #tpu.memory_space<vmem>>, vector<16x128xf32>
    tpu.vector_store %arg1[%c0_1, %c0_2], %0 {strides = array<i32>} : memref<16x128xf32, #tpu.memory_space<vmem>>, vector<16x128xf32>,
    return
  }
}

</mosaic_0001>

<llo_original>
// kernel: stroke_forward.1
$region0: #{stroke_forward.1}
  #allocation0 [shape = 'u32[]', space=smem, size = 0x4, offset = 0x4, fixed_abs, tag = 'smem constant byte address 0x4 - core index']
  #allocation1 [shape = 'u32[144,128]{1,0:T(1,128)}', space=vmem, size = 0x12000, scoped, tag = 'internal scratch']
  %s0 = inlined_call_operand.vmem [shape: f32[16,128], index: 0, kind: input, shape index: {}]
  %s1 = inlined_call_operand.vmem [shape: f32[16,128], index: 1, kind: output, shape index: {}]
  %s2 = sld [smem:[#allocation0]]
  $region14: #{stroke_forward.1} parent=0
    _
  %s4 = ssub.s32 1, %s2
  %s5 = scalar_select 0, %s4, %s2
  // Predicated region
  $region2: #{stroke_forward.1} parent=0 // pred_check
    _
  $region3: #{stroke_forward.1} parent=0 // pred_check_branch
    %7 = sbr.rel (0) target = $region5
  $region4: #{stroke_forward.1} parent=0 // pred_region
    _
  $region5: #{stroke_forward.1} parent=0 // pred_fallthru
    _
  %v8 = vld [vmem:[%s0] sm:$0xff]
  %v9 = vld [vmem:[%s0 + $0x8] sm:$0xff]
  %10 = vst [vmem:[%s1] sm:$0xff] %v8
  %11 = vst [vmem:[%s1 + $0x8] sm:$0xff] %v9
  // Predicated region
  $region6: #{stroke_forward.1} parent=0 // pred_check
    _
  $region7: #{stroke_forward.1} parent=0 // pred_check_branch
    %13 = sbr.rel (0) target = $region9
  $region8: #{stroke_forward.1} parent=0 // pred_region
    _
  $region9: #{stroke_forward.1} parent=0 // pred_fallthru
    _
  // Predicated region
  $region10: #{stroke_forward.1} parent=0 // pred_check
    _
  $region11: #{stroke_forward.1} parent=0 // pred_check_branch
    %15 = sbr.rel (0) target = $region13
  $region12: #{stroke_forward.1} parent=0 // pred_region
    _
  $region13: #{stroke_forward.1} parent=0 // pred_fallthru
    _

</llo_original>
